<compile_context>
chip_gen: v6e
topology: v6e:2x2x1
jax: 0.10.0
libtpu: 0.0.40
codegen_flags: <defaults>
</compile_context>

<pallas_src>
import functools
import math

import jax
import jax.numpy as jnp
import numpy as np
from jax import lax
from jax.experimental import pallas as pl
from jax.experimental.pallas import tpu as pltpu


def _dirac_shift_kernel(pos_ref, ev_ref, out_ref, *, n_levels):
    """One tile of event/batch rows, shifted by a per-row spike position.

    pos_ref: VMEM (rows, 1) int32   spike position per row (event-major)
    ev_ref:  VMEM (rows, N) f32     event signals
    out_ref: VMEM (rows, N) f32     dirac-convolved (lag-shifted) signals
    """
    x = ev_ref[...]                                   # (rows, N) full-tile load
    p = pos_ref[...]                                  # (rows, 1) int32

    # Barrel shifter: total roll by p == composition of static rolls by 2**k
    # for every set bit of p.  Static lane rotations go to the XLU slot; the
    # per-row gating is a full-vreg VPU select with a lane-broadcast mask.
    for k in range(n_levels):
        rot = pltpu.roll(x, 1 << k, axis=1)           # static XLU lane rotate
        bit = (p >> k) & 1                            # (rows, 1)
        x = jnp.where(bit > 0, rot, x)                # lane-broadcast select

    # Mask t < p to turn the circular shift into the causal/linear conv.
    t = lax.broadcasted_iota(jnp.int32, x.shape, 1)
    out_ref[...] = jnp.where(t >= p, x, 0.0).astype(out_ref.dtype)


def hierarchical_dirac_model_forward(elements, events, *, event_tile=16):
    """elements: (1, n_events, n_elements, 2); events: (batch, n_events, signal_size).

    Returns (batch, n_events, signal_size), matching the PyTorch module output.
    """
    B, E, N = events.shape
    n_lev = elements.shape[2]
    assert N == 2 ** n_lev, "signal_size must be 2**n_elements"

    # --- XLA side: decode each event's spike position from the logits --------
    # sparse_softmax(normalize=True) forward == one-hot at argmax of the two
    # logits per level; level 0 is the MSB of the position.
    el = elements[0]                                             # (E, n_lev, 2)
    bits = (el[..., 1] > el[..., 0]).astype(jnp.int32)           # (E, n_lev)
    weights = 2 ** jnp.arange(n_lev - 1, -1, -1, dtype=jnp.int32)
    pos = jnp.sum(bits * weights, axis=-1).astype(jnp.int32)     # (E,)
    pos_rows = jnp.repeat(pos, B)[:, None]                       # (E*B, 1)

    # --- tile selection: biggest divisor of E that keeps dense (8,128) blocks
    E_t = max(1, min(event_tile, E))
    while E % E_t:
        E_t -= 1
    if (E_t * B) % 8 or N % 128:
        E_t = E            # single block == full array shape (always legal)

    # Event-major, (event, batch) rows flattened so VMEM blocks are
    # sublane-dense and every load/store is unmasked.
    ev = jnp.transpose(events, (1, 0, 2)).reshape(E * B, N)

    kernel = functools.partial(_dirac_shift_kernel, n_levels=n_lev)

    out = pl.pallas_call(
        kernel,
        out_shape=jax.ShapeDtypeStruct((E * B, N), events.dtype),
        grid=(E // E_t,),
        in_specs=[
            pl.BlockSpec((E_t * B, 1), lambda i: (i, 0)),        # pos column
            pl.BlockSpec((E_t * B, N), lambda i: (i, 0)),        # event rows
        ],
        out_specs=pl.BlockSpec((E_t * B, N), lambda i: (i, 0)),
        compiler_params=pltpu.CompilerParams(
            dimension_semantics=("parallel",)),      # shardable on v7x 2 TCs
    )(pos_rows, ev)

    return jnp.transpose(out.reshape(E, B, N), (1, 0, 2))        # (B, E, N)


def _reference_forward(elements, events):
    """Pure-JAX reference mirroring hierarchical_dirac + fft_convolve."""
    n_lev = elements.shape[2]
    N = events.shape[-1]
    sel = (elements[..., 1] > elements[..., 0]).astype(events.dtype)     # (1, E, n_lev)
    weights = (2 ** jnp.arange(n_lev - 1, -1, -1)).astype(events.dtype)  # MSB first
    pos = jnp.sum(sel * weights, axis=-1).astype(jnp.int32)              # (1, E)
    dirac = jax.nn.one_hot(pos, N, dtype=events.dtype)                   # (1, E, N)
    a = jnp.pad(dirac, ((0, 0), (0, 0), (0, N)))
    b = jnp.pad(events, ((0, 0), (0, 0), (0, N)))
    spec = jnp.fft.rfft(a, axis=-1) * jnp.fft.rfft(b, axis=-1)
    return jnp.fft.irfft(spec, axis=-1)[..., :N]


if __name__ == "__main__":
    # Small shapes consistent with the module (n_events=32 from the file).
    n_events = 32
    signal_size = 128
    batch = 2
    n_elements = int(math.log2(signal_size))   # 7

    key = jax.random.PRNGKey(0)
    k1, k2 = jax.random.split(key)
    # nn.Parameter(torch.zeros(1, n_events, n_elements, 2).uniform_(-0.02, 0.02))
    elements = jax.random.uniform(
        k1, (1, n_events, n_elements, 2), minval=-0.02, maxval=0.02,
        dtype=jnp.float32)
    events = jax.random.normal(
        k2, (batch, n_events, signal_size), dtype=jnp.float32)

    out = hierarchical_dirac_model_forward(elements, events)
    out = jax.block_until_ready(out)
    assert out.shape == (batch, n_events, signal_size)

    ref = _reference_forward(elements, events)
    np.testing.assert_allclose(np.asarray(out), np.asarray(ref),
                               atol=1e-4, rtol=1e-4)
    # TODO(synk): straight-through (backward) semantics of sparse_softmax are
    # training-only and not represented here; forward one-hot is exact.
    print("KERNEL_OK")
</pallas_src>

<mosaic_0001>
module attributes {stable_mosaic.version = 11 : i64} {
  func.func @_dirac_shift_kernel(%arg0: i32, %arg1: memref<32x1xi32, #tpu.memory_space<vmem>>, %arg2: memref<32x128xf32, #tpu.memory_space<vmem>>, %arg3: memref<32x128xf32, #tpu.memory_space<vmem>>) attributes {dimension_semantics = [#tpu.dimension_semantics<parallel>], iteration_bounds = array<i64: 2>, scalar_prefetch = 0 : i64, scratch_operands = 0 : i64, tpu.core_type = #tpu.core_type<tc>, window_params = [{transform_indices = @transform_0, window_bounds = array<i64: 32, 1>}, {transform_indices = @transform_1, window_bounds = array<i64: 32, 128>}, {transform_indices = @transform_2, window_bounds = array<i64: 32, 128>}]} {
    %c0 = arith.constant 0 : index
    %c0_0 = arith.constant 0 : index
    %0 = vector.load %arg2[%c0, %c0_0] : memref<32x128xf32, #tpu.memory_space<vmem>>, vector<32x128xf32>
    %c0_1 = arith.constant 0 : index
    %c0_2 = arith.constant 0 : index
    %1 = vector.load %arg1[%c0_1, %c0_2] : memref<32x1xi32, #tpu.memory_space<vmem>>, vector<32x1xi32>
    %c1_i32 = arith.constant 1 : i32
    %2 = tpu.dynamic_rotate %0 by %c1_i32 dim 1 : vector<32x128xf32>, i32 -> vector<32x128xf32>
    %c0_i32 = arith.constant 0 : i32
    %3 = vector.broadcast %c0_i32 : i32 to vector<32x1xi32>
    %4 = arith.shrsi %1, %3 : vector<32x1xi32>
    %c1_i32_3 = arith.constant 1 : i32
    %5 = vector.broadcast %c1_i32_3 : i32 to vector<32x1xi32>
    %6 = arith.andi %4, %5 : vector<32x1xi32>
    %c0_i32_4 = arith.constant 0 : i32
    %7 = vector.broadcast %c0_i32_4 : i32 to vector<32x1xi32>
    %8 = arith.cmpi sgt, %6, %7 : vector<32x1xi32>
    %9 = vector.shape_cast %8 : vector<32x1xi1> to vector<32x1xi1>
    %10 = vector.broadcast %9 : vector<32x1xi1> to vector<32x128xi1>
    %11 = arith.select %10, %2, %0 : vector<32x128xi1>, vector<32x128xf32>
    %c2_i32 = arith.constant 2 : i32
    %12 = tpu.dynamic_rotate %11 by %c2_i32 dim 1 : vector<32x128xf32>, i32 -> vector<32x128xf32>
    %c1_i32_5 = arith.constant 1 : i32
    %13 = vector.broadcast %c1_i32_5 : i32 to vector<32x1xi32>
    %14 = arith.shrsi %1, %13 : vector<32x1xi32>
    %c1_i32_6 = arith.constant 1 : i32
    %15 = vector.broadcast %c1_i32_6 : i32 to vector<32x1xi32>
    %16 = arith.andi %14, %15 : vector<32x1xi32>
    %c0_i32_7 = arith.constant 0 : i32
    %17 = vector.broadcast %c0_i32_7 : i32 to vector<32x1xi32>
    %18 = arith.cmpi sgt, %16, %17 : vector<32x1xi32>
    %19 = vector.shape_cast %18 : vector<32x1xi1> to vector<32x1xi1>
    %20 = vector.broadcast %19 : vector<32x1xi1> to vector<32x128xi1>
    %21 = arith.select %20, %12, %11 : vector<32x128xi1>, vector<32x128xf32>
    %c4_i32 = arith.constant 4 : i32
    %22 = tpu.dynamic_rotate %21 by %c4_i32 dim 1 : vector<32x128xf32>, i32 -> vector<32x128xf32>
    %c2_i32_8 = arith.constant 2 : i32
    %23 = vector.broadcast %c2_i32_8 : i32 to vector<32x1xi32>
    %24 = arith.shrsi %1, %23 : vector<32x1xi32>
    %c1_i32_9 = arith.constant 1 : i32
    %25 = vector.broadcast %c1_i32_9 : i32 to vector<32x1xi32>
    %26 = arith.andi %24, %25 : vector<32x1xi32>
    %c0_i32_10 = arith.constant 0 : i32
    %27 = vector.broadcast %c0_i32_10 : i32 to vector<32x1xi32>
    %28 = arith.cmpi sgt, %26, %27 : vector<32x1xi32>
    %29 = vector.shape_cast %28 : vector<32x1xi1> to vector<32x1xi1>
    %30 = vector.broadcast %29 : vector<32x1xi1> to vector<32x128xi1>
    %31 = arith.select %30, %22, %21 : vector<32x128xi1>, vector<32x128xf32>
    %c8_i32 = arith.constant 8 : i32
    %32 = tpu.dynamic_rotate %31 by %c8_i32 dim 1 : vector<32x128xf32>, i32 -> vector<32x128xf32>
    %c3_i32 = arith.constant 3 : i32
    %33 = vector.broadcast %c3_i32 : i32 to vector<32x1xi32>
    %34 = arith.shrsi %1, %33 : vector<32x1xi32>
    %c1_i32_11 = arith.constant 1 : i32
    %35 = vector.broadcast %c1_i32_11 : i32 to vector<32x1xi32>
    %36 = arith.andi %34, %35 : vector<32x1xi32>
    %c0_i32_12 = arith.constant 0 : i32
    %37 = vector.broadcast %c0_i32_12 : i32 to vector<32x1xi32>
    %38 = arith.cmpi sgt, %36, %37 : vector<32x1xi32>
    %39 = vector.shape_cast %38 : vector<32x1xi1> to vector<32x1xi1>
    %40 = vector.broadcast %39 : vector<32x1xi1> to vector<32x128xi1>
    %41 = arith.select %40, %32, %31 : vector<32x128xi1>, vector<32x128xf32>
    %c16_i32 = arith.constant 16 : i32
    %42 = tpu.dynamic_rotate %41 by %c16_i32 dim 1 : vector<32x128xf32>, i32 -> vector<32x128xf32>
    %c4_i32_13 = arith.constant 4 : i32
    %43 = vector.broadcast %c4_i32_13 : i32 to vector<32x1xi32>
    %44 = arith.shrsi %1, %43 : vector<32x1xi32>
    %c1_i32_14 = arith.constant 1 : i32
    %45 = vector.broadcast %c1_i32_14 : i32 to vector<32x1xi32>
    %46 = arith.andi %44, %45 : vector<32x1xi32>
    %c0_i32_15 = arith.constant 0 : i32
    %47 = vector.broadcast %c0_i32_15 : i32 to vector<32x1xi32>
    %48 = arith.cmpi sgt, %46, %47 : vector<32x1xi32>
    %49 = vector.shape_cast %48 : vector<32x1xi1> to vector<32x1xi1>
    %50 = vector.broadcast %49 : vector<32x1xi1> to vector<32x128xi1>
    %51 = arith.select %50, %42, %41 : vector<32x128xi1>, vector<32x128xf32>
    %c32_i32 = arith.constant 32 : i32
    %52 = tpu.dynamic_rotate %51 by %c32_i32 dim 1 : vector<32x128xf32>, i32 -> vector<32x128xf32>
    %c5_i32 = arith.constant 5 : i32
    %53 = vector.broadcast %c5_i32 : i32 to vector<32x1xi32>
    %54 = arith.shrsi %1, %53 : vector<32x1xi32>
    %c1_i32_16 = arith.constant 1 : i32
    %55 = vector.broadcast %c1_i32_16 : i32 to vector<32x1xi32>
    %56 = arith.andi %54, %55 : vector<32x1xi32>
    %c0_i32_17 = arith.constant 0 : i32
    %57 = vector.broadcast %c0_i32_17 : i32 to vector<32x1xi32>
    %58 = arith.cmpi sgt, %56, %57 : vector<32x1xi32>
    %59 = vector.shape_cast %58 : vector<32x1xi1> to vector<32x1xi1>
    %60 = vector.broadcast %59 : vector<32x1xi1> to vector<32x128xi1>
    %61 = arith.select %60, %52, %51 : vector<32x128xi1>, vector<32x128xf32>
    %c64_i32 = arith.constant 64 : i32
    %62 = tpu.dynamic_rotate %61 by %c64_i32 dim 1 : vector<32x128xf32>, i32 -> vector<32x128xf32>
    %c6_i32 = arith.constant 6 : i32
    %63 = vector.broadcast %c6_i32 : i32 to vector<32x1xi32>
    %64 = arith.shrsi %1, %63 : vector<32x1xi32>
    %c1_i32_18 = arith.constant 1 : i32
    %65 = vector.broadcast %c1_i32_18 : i32 to vector<32x1xi32>
    %66 = arith.andi %64, %65 : vector<32x1xi32>
    %c0_i32_19 = arith.constant 0 : i32
    %67 = vector.broadcast %c0_i32_19 : i32 to vector<32x1xi32>
    %68 = arith.cmpi sgt, %66, %67 : vector<32x1xi32>
    %69 = vector.shape_cast %68 : vector<32x1xi1> to vector<32x1xi1>
    %70 = vector.broadcast %69 : vector<32x1xi1> to vector<32x128xi1>
    %71 = arith.select %70, %62, %61 : vector<32x128xi1>, vector<32x128xf32>
    %72 = tpu.iota {dimensions = array<i32: 1>} : vector<32x128xi32>
    %73 = vector.broadcast %1 : vector<32x1xi32> to vector<32x128xi32>
    %74 = arith.cmpi sge, %72, %73 : vector<32x128xi32>
    %cst = arith.constant 0.000000e+00 : f32
    %75 = vector.broadcast %cst : f32 to vector<32x128xf32>
    %76 = arith.select %74, %71, %75 : vector<32x128xi1>, vector<32x128xf32>
    %c0_20 = arith.constant 0 : index
    %c0_21 = arith.constant 0 : index
    %77 = vector.load %arg3[%c0_20, %c0_21] : memref<32x128xf32, #tpu.memory_space<vmem>>, vector<32x128xf32>
    tpu.vector_store %arg3[%c0_20, %c0_21], %76 {strides = array<i32>} : memref<32x128xf32, #tpu.memory_space<vmem>>, vector<32x128xf32>,
    return
  }
  func.func @transform_0(%arg0: i32) -> (i32, i32) {
    %c0_i32 = arith.constant 0 : i32
    %c0_i32_0 = arith.constant 0 : i32
    return %arg0, %c0_i32 : i32, i32
  }
  func.func @transform_1(%arg0: i32) -> (i32, i32) {
    %c0_i32 = arith.constant 0 : i32
    %c0_i32_0 = arith.constant 0 : i32
    return %arg0, %c0_i32 : i32, i32
  }
  func.func @transform_2(%arg0: i32) -> (i32, i32) {
    %c0_i32 = arith.constant 0 : i32
    %c0_i32_0 = arith.constant 0 : i32
    return %arg0, %c0_i32 : i32, i32
  }
}

</mosaic_0001>

<llo_original>
// kernel: tpu_custom_call.1
$region0: #{tpu_custom_call.1}
  #allocation0 [shape = 'u32[]', space=smem, size = 0x4, offset = 0x4, fixed_abs, tag = 'smem constant byte address 0x4 - core index']
  #allocation1 [shape = 'u32[144,128]{1,0:T(1,128)}', space=vmem, size = 0x12000, scoped, tag = 'internal scratch']
  %s0 = inlined_call_operand.vmem [shape: s32[64,1], index: 0, kind: input, shape index: {}]
  %s1 = inlined_call_operand.vmem [shape: f32[64,128], index: 1, kind: input, shape index: {}]
  %s2 = inlined_call_operand.hbm [shape: f32[64,128], index: 2, kind: output, shape index: {}]
  %s3 = sld [smem:[#allocation0]]
  $region41: #{tpu_custom_call.1} parent=0
    _
  %s5 = ssub.s32 1, %s3
  %s6 = scalar_select 0, %s5, %s3
  $region1: #{tpu_custom_call.1} parent=0
    #allocation2 [shape = 'u8[32768]{0}', space=vmem, size = 0x8000, scoped, tag = 'output window, operand 0']
    #allocation3 [shape = 's32[2]{0}', space=sflag, size = 0x8, scoped, tag = 'scoped memory for tpu_custom_call.1']
    %7 = vsyncpa [#allocation3], 0
    %s8 = scalar_lea.sflag [#allocation3], 1
    %9 = vsyncpa %s8, 0
    loop: start=0, step=1, limit=4
    $region2: #{tpu_custom_call.1} parent=1 // loop_pre_header
      _
    $region3: #{tpu_custom_call.1} parent=1 // loop_header
      %s11 = sphi 0, %s15
      %p12 = scmp.ge.s32.totalorder %s11, 4
      %s21 = sphi 0, %s23
      %s24 = sphi 0, %s21
      %s25 = sphi 0, %s24
      %s41 = sphi 0, %s25
      %s47 = sphi 0, %s49
      %s50 = sphi 0, %s47
      %s51 = sphi 0, %s50
      %s67 = sphi 0, %s51
      %s73 = sphi 0, %s75
      %s76 = sphi 0, %s73
      %s77 = sphi 0, %s76
      %s93 = sphi 0, %s77
    $region4: #{tpu_custom_call.1} parent=1 // loop_header_branch
      %14 = sbr.rel (%p12) target = $region8
    $region5: #{tpu_custom_call.1} parent=1 // loop_body
      %s16 = ssub.s32 %s11, 1
      %s17 = ssub.s32 %s11, 2
      %s18 = sadd.s32 %s11, 1
      %s19 = ssub.s32 %s11, %s18
      %p20 = scmp.eq.s32.totalorder %s19, 0
      %s22 = sadd.s32 %s21, 1
      %s23 = scalar_select %p20, %s21, %s22
      %p26 = pneg %p20
      %p27 = scmp.eq.s32.totalorder %s11, 1
      %p28 = por %p26, %p27
      %p29 = scmp.ne.s32.totalorder %s21, %s24
      %p30 = scmp.eq.s32.totalorder %s11, 0
      %p31 = por %p29, %p30
      %p32 = scmp.ne.s32.totalorder %s21, %s24
      %p33 = scmp.eq.s32.totalorder %s16, 1
      %p34 = por %p32, %p33
      %p35 = scmp.ne.s32.totalorder %s24, %s25
      %p36 = scmp.eq.s32.totalorder %s16, 0
      %p37 = por %p35, %p36
      %p38 = scmp.ne.s32.totalorder %s24, %s25
      %p39 = scmp.eq.s32.totalorder %s17, 1
      %p40 = por %p38, %p39
      %p42 = scmp.ne.s32.totalorder %s25, %s41
      %p43 = scmp.eq.s32.totalorder %s17, 0
      %p44 = por %p42, %p43
      %s45 = ssub.s32 %s11, %s18
      %p46 = scmp.eq.s32.totalorder %s45, 0
      %s48 = sadd.s32 %s47, 1
      %s49 = scalar_select %p46, %s47, %s48
      %p52 = pneg %p46
      %p53 = scmp.eq.s32.totalorder %s11, 1
      %p54 = por %p52, %p53
      %p55 = scmp.ne.s32.totalorder %s47, %s50
      %p56 = scmp.eq.s32.totalorder %s11, 0
      %p57 = por %p55, %p56
      %p58 = scmp.ne.s32.totalorder %s47, %s50
      %p59 = scmp.eq.s32.totalorder %s16, 1
      %p60 = por %p58, %p59
      %p61 = scmp.ne.s32.totalorder %s50, %s51
      %p62 = scmp.eq.s32.totalorder %s16, 0
      %p63 = por %p61, %p62
      %p64 = scmp.ne.s32.totalorder %s50, %s51
      %p65 = scmp.eq.s32.totalorder %s17, 1
      %p66 = por %p64, %p65
      %p68 = scmp.ne.s32.totalorder %s51, %s67
      %p69 = scmp.eq.s32.totalorder %s17, 0
      %p70 = por %p68, %p69
      %s71 = ssub.s32 %s11, %s18
      %p72 = scmp.eq.s32.totalorder %s71, 0
      %s74 = sadd.s32 %s73, 1
      %s75 = scalar_select %p72, %s73, %s74
      %p78 = pneg %p72
      %p79 = scmp.eq.s32.totalorder %s11, 1
      %p80 = por %p78, %p79
      %p81 = scmp.ne.s32.totalorder %s73, %s76
      %p82 = scmp.eq.s32.totalorder %s11, 0
      %p83 = por %p81, %p82
      %p84 = scmp.ne.s32.totalorder %s73, %s76
      %p85 = scmp.eq.s32.totalorder %s16, 1
      %p86 = por %p84, %p85
      %p87 = scmp.ne.s32.totalorder %s76, %s77
      %p88 = scmp.eq.s32.totalorder %s16, 0
      %p89 = por %p87, %p88
      %p90 = scmp.ne.s32.totalorder %s76, %s77
      %p91 = scmp.eq.s32.totalorder %s17, 1
      %p92 = por %p90, %p91
      %p94 = scmp.ne.s32.totalorder %s77, %s93
      %p95 = scmp.eq.s32.totalorder %s17, 0
      %p96 = por %p94, %p95
      %p97 = scmp.le.s32.totalorder 1, %s11
      %p98 = scmp.lt.s32.totalorder %s11, 3
      %p99 = pnand %p97, %p98
      %p100 = pneg %p99
      // Predicated region
      $region9: #{tpu_custom_call.1} parent=5 // pred_check
        _
      $region10: #{tpu_custom_call.1} parent=5 // pred_check_branch
        %102 = sbr.rel (%p99) target = $region12
      $region11: #{tpu_custom_call.1} parent=5 // pred_region
        %s103 = ssub.s32 %s11, 1
      $region12: #{tpu_custom_call.1} parent=5 // pred_fallthru
        _
      %p104 = scmp.lt.s32.totalorder %s11, 2
      // Predicated region
      $region13: #{tpu_custom_call.1} parent=5 // pred_check
        %p105 = pneg %p104
      $region14: #{tpu_custom_call.1} parent=5 // pred_check_branch
        %107 = sbr.rel (%p105) target = $region16
      $region15: #{tpu_custom_call.1} parent=5 // pred_region
        // Predicated region
        $region17: #{tpu_custom_call.1} parent=15 // pred_check
          %p108 = pneg %p31
        $region18: #{tpu_custom_call.1} parent=15 // pred_check_branch
          %110 = sbr.rel (%p108) target = $region20
        $region19: #{tpu_custom_call.1} parent=15 // pred_region
          %s111 = smul.u32 4, %s11
          %p112 = scmp.lt.s32.totalorder %s111, 7
          %s113 = scalar_select %p112, %s111, 7
          %s114 = smul.addr %s113, 8
          %s115 = scalar_lea.vmem %s0, %s114
          %s116 = smul.u32 4, %s11
        $region20: #{tpu_custom_call.1} parent=15 // pred_fallthru
          _
        // Predicated region
        $region21: #{tpu_custom_call.1} parent=15 // pred_check
          %p117 = pneg %p57
        $region22: #{tpu_custom_call.1} parent=15 // pred_check_branch
          %119 = sbr.rel (%p117) target = $region24
        $region23: #{tpu_custom_call.1} parent=15 // pred_region
          %s120 = smul.u32 4, %s11
          %p121 = scmp.lt.s32.totalorder %s120, 7
          %s122 = scalar_select %p121, %s120, 7
          %s123 = smul.addr %s122, 8
          %s124 = scalar_lea.vmem %s1, %s123
          %s125 = smul.u32 4, %s11
        $region24: #{tpu_custom_call.1} parent=15 // pred_fallthru
          _
      $region16: #{tpu_custom_call.1} parent=5 // pred_fallthru
        _
      %p126 = scmp.le.s32.totalorder 1, %s11
      %p127 = scmp.lt.s32.totalorder %s11, 3
      %p128 = pnand %p126, %p127
      %p129 = pneg %p128
      // Predicated region
      $region25: #{tpu_custom_call.1} parent=5 // pred_check
        _
      $region26: #{tpu_custom_call.1} parent=5 // pred_check_branch
        %131 = sbr.rel (%p128) target = $region28
      $region27: #{tpu_custom_call.1} parent=5 // pred_region
        %s132 = ssub.s32 %s11, 1
        %s133 = smul.u32 4, %s16
        %p134 = scmp.lt.s32.totalorder %s133, 7
        %s135 = scalar_select %p134, %s133, 7
        %s136 = smul.addr %s135, 8
        %s137 = scalar_lea.vmem %s0, %s136
        %p138 = pneg %p37
        %p139 = pneg %p34
        %s140 = smul.u32 4, %s16
        %p141 = scmp.lt.s32.totalorder %s140, 7
        %s142 = scalar_select %p141, %s140, 7
        %s143 = smul.addr %s142, 8
        %s144 = scalar_lea.vmem %s1, %s143
        %p145 = pneg %p63
        %p146 = pneg %p60
        %p147 = pneg %p89
        %p148 = pneg %p86
        %s149 = sand.u32 %s76, 1
        %s150 = scalar_lea.sflag [#allocation3], %s149
        %s151 = sand.u32 %s76, 1
        %s152 = smul.addr %s151, 32
        %s153 = scalar_lea.vmem [#allocation2], %s152
        %s154 = smul.u32 4, %s16
        %p155 = scmp.lt.s32.totalorder %s154, 7
        %s156 = scalar_select %p155, %s154, 7
        %s157 = smul.addr %s156, 8
        %s158 = scalar_lea.vmem %s0, %s157
        %s159 = smul.u32 4, %s16
        %s160 = smul.u32 4, %s16
        %p161 = scmp.lt.s32.totalorder %s160, 7
        %s162 = scalar_select %p161, %s160, 7
        %s163 = smul.addr %s162, 8
        %s164 = scalar_lea.vmem %s1, %s163
        %s165 = smul.u32 4, %s16
        %s166 = smul.u32 4, %s16
        %v167 = vld [vmem:[%s164] sm:$0xff]
        %v168 = vld [vmem:[%s164 + $0x8] sm:$0xff]
        %v169 = vld [vmem:[%s164 + $0x10] sm:$0xff]
        %v170 = vld [vmem:[%s164 + $0x18] sm:$0xff]
        %v171 = vld [vmem:[%s158] sm:$0xff]
        %v172 = vld [vmem:[%s158 + $0x8] sm:$0xff]
        %v173 = vld [vmem:[%s158 + $0x10] sm:$0xff]
        %v174 = vld [vmem:[%s158 + $0x18] sm:$0xff]
        %175 = vrot.lane.b32.xlu0 %v167, 1
        %v176 = vpop.permute.xlu0 %175
        %177 = vrot.lane.b32.xlu0 %v168, 1
        %v178 = vpop.permute.xlu0 %177
        %179 = vrot.lane.b32.xlu0 %v169, 1
        %v180 = vpop.permute.xlu0 %179
        %181 = vrot.lane.b32.xlu0 %v170, 1
        %v182 = vpop.permute.xlu0 %181
        %v183 = vand.u32 %v171, 1
        %v184 = vand.u32 %v172, 1
        %v185 = vand.u32 %v173, 1
        %v186 = vand.u32 %v174, 1
        %vm187 = vcmp.gt.s32.totalorder %v183, 0
        %vm188 = vcmp.gt.s32.totalorder %v184, 0
        %vm189 = vcmp.gt.s32.totalorder %v185, 0
        %vm190 = vcmp.gt.s32.totalorder %v186, 0
        %v191 = vsel %vm187, 1, 0
        %v192 = vsel %vm188, 1, 0
        %v193 = vsel %vm189, 1, 0
        %v194 = vsel %vm190, 1, 0
        %195 = vset.pattern.permute.xlu0 0
        %196 = vperm.xlu0 %195, %v191
        %v197 = vpop.permute.xlu0 %196
        %198 = vset.pattern.permute.xlu0 0
        %199 = vperm.xlu0 %198, %v192
        %v200 = vpop.permute.xlu0 %199
        %201 = vset.pattern.permute.xlu0 0
        %202 = vperm.xlu0 %201, %v193
        %v203 = vpop.permute.xlu0 %202
        %204 = vset.pattern.permute.xlu0 0
        %205 = vperm.xlu0 %204, %v194
        %v206 = vpop.permute.xlu0 %205
        %vm207 = vcmp.eq.s32.totalorder %v197, 1
        %vm208 = vcmp.eq.s32.totalorder %v200, 1
        %vm209 = vcmp.eq.s32.totalorder %v203, 1
        %vm210 = vcmp.eq.s32.totalorder %v206, 1
        %v211 = vsel %vm207, %v176, %v167
        %v212 = vsel %vm208, %v178, %v168
        %v213 = vsel %vm209, %v180, %v169
        %v214 = vsel %vm210, %v182, %v170
        %215 = vrot.lane.b32.xlu0 %v211, 2
        %v216 = vpop.permute.xlu0 %215
        %217 = vrot.lane.b32.xlu0 %v212, 2
        %v218 = vpop.permute.xlu0 %217
        %219 = vrot.lane.b32.xlu0 %v213, 2
        %v220 = vpop.permute.xlu0 %219
        %221 = vrot.lane.b32.xlu0 %v214, 2
        %v222 = vpop.permute.xlu0 %221
        %v223 = vshra.s32 %v171, 1
        %v224 = vshra.s32 %v172, 1
        %v225 = vshra.s32 %v173, 1
        %v226 = vshra.s32 %v174, 1
        %v227 = vand.u32 %v223, 1
        %v228 = vand.u32 %v224, 1
        %v229 = vand.u32 %v225, 1
        %v230 = vand.u32 %v226, 1
        %vm231 = vcmp.gt.s32.totalorder %v227, 0
        %vm232 = vcmp.gt.s32.totalorder %v228, 0
        %vm233 = vcmp.gt.s32.totalorder %v229, 0
        %vm234 = vcmp.gt.s32.totalorder %v230, 0
        %v235 = vsel %vm231, 1, 0
        %v236 = vsel %vm232, 1, 0
        %v237 = vsel %vm233, 1, 0
        %v238 = vsel %vm234, 1, 0
        %239 = vset.pattern.permute.xlu0 0
        %240 = vperm.xlu0 %239, %v235
        %v241 = vpop.permute.xlu0 %240
        %242 = vset.pattern.permute.xlu0 0
        %243 = vperm.xlu0 %242, %v236
        %v244 = vpop.permute.xlu0 %243
        %245 = vset.pattern.permute.xlu0 0
        %246 = vperm.xlu0 %245, %v237
        %v247 = vpop.permute.xlu0 %246
        %248 = vset.pattern.permute.xlu0 0
        %249 = vperm.xlu0 %248, %v238
        %v250 = vpop.permute.xlu0 %249
        %vm251 = vcmp.eq.s32.totalorder %v241, 1
        %vm252 = vcmp.eq.s32.totalorder %v244, 1
        %vm253 = vcmp.eq.s32.totalorder %v247, 1
        %vm254 = vcmp.eq.s32.totalorder %v250, 1
        %v255 = vsel %vm251, %v216, %v211
        %v256 = vsel %vm252, %v218, %v212
        %v257 = vsel %vm253, %v220, %v213
        %v258 = vsel %vm254, %v222, %v214
        %259 = vrot.lane.b32.xlu0 %v255, 4
        %v260 = vpop.permute.xlu0 %259
        %261 = vrot.lane.b32.xlu0 %v256, 4
        %v262 = vpop.permute.xlu0 %261
        %263 = vrot.lane.b32.xlu0 %v257, 4
        %v264 = vpop.permute.xlu0 %263
        %265 = vrot.lane.b32.xlu0 %v258, 4
        %v266 = vpop.permute.xlu0 %265
        %v267 = vshra.s32 %v171, 2
        %v268 = vshra.s32 %v172, 2
        %v269 = vshra.s32 %v173, 2
        %v270 = vshra.s32 %v174, 2
        %v271 = vand.u32 %v267, 1
        %v272 = vand.u32 %v268, 1
        %v273 = vand.u32 %v269, 1
        %v274 = vand.u32 %v270, 1
        %vm275 = vcmp.gt.s32.totalorder %v271, 0
        %vm276 = vcmp.gt.s32.totalorder %v272, 0
        %vm277 = vcmp.gt.s32.totalorder %v273, 0
        %vm278 = vcmp.gt.s32.totalorder %v274, 0
        %v279 = vsel %vm275, 1, 0
        %v280 = vsel %vm276, 1, 0
        %v281 = vsel %vm277, 1, 0
        %v282 = vsel %vm278, 1, 0
        %283 = vset.pattern.permute.xlu0 0
        %284 = vperm.xlu0 %283, %v279
        %v285 = vpop.permute.xlu0 %284
        %286 = vset.pattern.permute.xlu0 0
        %287 = vperm.xlu0 %286, %v280
        %v288 = vpop.permute.xlu0 %287
        %289 = vset.pattern.permute.xlu0 0
        %290 = vperm.xlu0 %289, %v281
        %v291 = vpop.permute.xlu0 %290
        %292 = vset.pattern.permute.xlu0 0
        %293 = vperm.xlu0 %292, %v282
        %v294 = vpop.permute.xlu0 %293
        %vm295 = vcmp.eq.s32.totalorder %v285, 1
        %vm296 = vcmp.eq.s32.totalorder %v288, 1
        %vm297 = vcmp.eq.s32.totalorder %v291, 1
        %vm298 = vcmp.eq.s32.totalorder %v294, 1
        %v299 = vsel %vm295, %v260, %v255
        %v300 = vsel %vm296, %v262, %v256
        %v301 = vsel %vm297, %v264, %v257
        %v302 = vsel %vm298, %v266, %v258
        %303 = vrot.lane.b32.xlu0 %v299, 8
        %v304 = vpop.permute.xlu0 %303
        %305 = vrot.lane.b32.xlu0 %v300, 8
        %v306 = vpop.permute.xlu0 %305
        %307 = vrot.lane.b32.xlu0 %v301, 8
        %v308 = vpop.permute.xlu0 %307
        %309 = vrot.lane.b32.xlu0 %v302, 8
        %v310 = vpop.permute.xlu0 %309
        %v311 = vshra.s32 %v171, 3
        %v312 = vshra.s32 %v172, 3
        %v313 = vshra.s32 %v173, 3
        %v314 = vshra.s32 %v174, 3
        %v315 = vand.u32 %v311, 1
        %v316 = vand.u32 %v312, 1
        %v317 = vand.u32 %v313, 1
        %v318 = vand.u32 %v314, 1
        %vm319 = vcmp.gt.s32.totalorder %v315, 0
        %vm320 = vcmp.gt.s32.totalorder %v316, 0
        %vm321 = vcmp.gt.s32.totalorder %v317, 0
        %vm322 = vcmp.gt.s32.totalorder %v318, 0
        %v323 = vsel %vm319, 1, 0
        %v324 = vsel %vm320, 1, 0
        %v325 = vsel %vm321, 1, 0
        %v326 = vsel %vm322, 1, 0
        %327 = vset.pattern.permute.xlu0 0
        %328 = vperm.xlu0 %327, %v323
        %v329 = vpop.permute.xlu0 %328
        %330 = vset.pattern.permute.xlu0 0
        %331 = vperm.xlu0 %330, %v324
        %v332 = vpop.permute.xlu0 %331
        %333 = vset.pattern.permute.xlu0 0
        %334 = vperm.xlu0 %333, %v325
        %v335 = vpop.permute.xlu0 %334
        %336 = vset.pattern.permute.xlu0 0
        %337 = vperm.xlu0 %336, %v326
        %v338 = vpop.permute.xlu0 %337
        %vm339 = vcmp.eq.s32.totalorder %v329, 1
        %vm340 = vcmp.eq.s32.totalorder %v332, 1
        %vm341 = vcmp.eq.s32.totalorder %v335, 1
        %vm342 = vcmp.eq.s32.totalorder %v338, 1
        %v343 = vsel %vm339, %v304, %v299
        %v344 = vsel %vm340, %v306, %v300
        %v345 = vsel %vm341, %v308, %v301
        %v346 = vsel %vm342, %v310, %v302
        %347 = vrot.lane.b32.xlu0 %v343, 16
        %v348 = vpop.permute.xlu0 %347
        %349 = vrot.lane.b32.xlu0 %v344, 16
        %v350 = vpop.permute.xlu0 %349
        %351 = vrot.lane.b32.xlu0 %v345, 16
        %v352 = vpop.permute.xlu0 %351
        %353 = vrot.lane.b32.xlu0 %v346, 16
        %v354 = vpop.permute.xlu0 %353
        %v355 = vshra.s32 %v171, 4
        %v356 = vshra.s32 %v172, 4
        %v357 = vshra.s32 %v173, 4
        %v358 = vshra.s32 %v174, 4
        %v359 = vand.u32 %v355, 1
        %v360 = vand.u32 %v356, 1
        %v361 = vand.u32 %v357, 1
        %v362 = vand.u32 %v358, 1
        %vm363 = vcmp.gt.s32.totalorder %v359, 0
        %vm364 = vcmp.gt.s32.totalorder %v360, 0
        %vm365 = vcmp.gt.s32.totalorder %v361, 0
        %vm366 = vcmp.gt.s32.totalorder %v362, 0
        %v367 = vsel %vm363, 1, 0
        %v368 = vsel %vm364, 1, 0
        %v369 = vsel %vm365, 1, 0
        %v370 = vsel %vm366, 1, 0
        %371 = vset.pattern.permute.xlu0 0
        %372 = vperm.xlu0 %371, %v367
        %v373 = vpop.permute.xlu0 %372
        %374 = vset.pattern.permute.xlu0 0
        %375 = vperm.xlu0 %374, %v368
        %v376 = vpop.permute.xlu0 %375
        %377 = vset.pattern.permute.xlu0 0
        %378 = vperm.xlu0 %377, %v369
        %v379 = vpop.permute.xlu0 %378
        %380 = vset.pattern.permute.xlu0 0
        %381 = vperm.xlu0 %380, %v370
        %v382 = vpop.permute.xlu0 %381
        %vm383 = vcmp.eq.s32.totalorder %v373, 1
        %vm384 = vcmp.eq.s32.totalorder %v376, 1
        %vm385 = vcmp.eq.s32.totalorder %v379, 1
        %vm386 = vcmp.eq.s32.totalorder %v382, 1
        %v387 = vsel %vm383, %v348, %v343
        %v388 = vsel %vm384, %v350, %v344
        %v389 = vsel %vm385, %v352, %v345
        %v390 = vsel %vm386, %v354, %v346
        %391 = vrot.lane.b32.xlu0 %v387, 32
        %v392 = vpop.permute.xlu0 %391
        %393 = vrot.lane.b32.xlu0 %v388, 32
        %v394 = vpop.permute.xlu0 %393
        %395 = vrot.lane.b32.xlu0 %v389, 32
        %v396 = vpop.permute.xlu0 %395
        %397 = vrot.lane.b32.xlu0 %v390, 32
        %v398 = vpop.permute.xlu0 %397
        %v399 = vshra.s32 %v171, 5
        %v400 = vshra.s32 %v172, 5
        %v401 = vshra.s32 %v173, 5
        %v402 = vshra.s32 %v174, 5
        %v403 = vand.u32 %v399, 1
        %v404 = vand.u32 %v400, 1
        %v405 = vand.u32 %v401, 1
        %v406 = vand.u32 %v402, 1
        %vm407 = vcmp.gt.s32.totalorder %v403, 0
        %vm408 = vcmp.gt.s32.totalorder %v404, 0
        %vm409 = vcmp.gt.s32.totalorder %v405, 0
        %vm410 = vcmp.gt.s32.totalorder %v406, 0
        %v411 = vsel %vm407, 1, 0
        %v412 = vsel %vm408, 1, 0
        %v413 = vsel %vm409, 1, 0
        %v414 = vsel %vm410, 1, 0
        %415 = vset.pattern.permute.xlu0 0
        %416 = vperm.xlu0 %415, %v411
        %v417 = vpop.permute.xlu0 %416
        %418 = vset.pattern.permute.xlu0 0
        %419 = vperm.xlu0 %418, %v412
        %v420 = vpop.permute.xlu0 %419
        %421 = vset.pattern.permute.xlu0 0
        %422 = vperm.xlu0 %421, %v413
        %v423 = vpop.permute.xlu0 %422
        %424 = vset.pattern.permute.xlu0 0
        %425 = vperm.xlu0 %424, %v414
        %v426 = vpop.permute.xlu0 %425
        %vm427 = vcmp.eq.s32.totalorder %v417, 1
        %vm428 = vcmp.eq.s32.totalorder %v420, 1
        %vm429 = vcmp.eq.s32.totalorder %v423, 1
        %vm430 = vcmp.eq.s32.totalorder %v426, 1
        %v431 = vsel %vm427, %v392, %v387
        %v432 = vsel %vm428, %v394, %v388
        %v433 = vsel %vm429, %v396, %v389
        %v434 = vsel %vm430, %v398, %v390
        %435 = vrot.lane.b32.xlu0 %v431, 64
        %v436 = vpop.permute.xlu0 %435
        %437 = vrot.lane.b32.xlu0 %v432, 64
        %v438 = vpop.permute.xlu0 %437
        %439 = vrot.lane.b32.xlu0 %v433, 64
        %v440 = vpop.permute.xlu0 %439
        %441 = vrot.lane.b32.xlu0 %v434, 64
        %v442 = vpop.permute.xlu0 %441
        %v443 = vshra.s32 %v171, 6
        %v444 = vshra.s32 %v172, 6
        %v445 = vshra.s32 %v173, 6
        %v446 = vshra.s32 %v174, 6
        %v447 = vand.u32 %v443, 1
        %v448 = vand.u32 %v444, 1
        %v449 = vand.u32 %v445, 1
        %v450 = vand.u32 %v446, 1
        %vm451 = vcmp.gt.s32.totalorder %v447, 0
        %vm452 = vcmp.gt.s32.totalorder %v448, 0
        %vm453 = vcmp.gt.s32.totalorder %v449, 0
        %vm454 = vcmp.gt.s32.totalorder %v450, 0
        %v455 = vsel %vm451, 1, 0
        %v456 = vsel %vm452, 1, 0
        %v457 = vsel %vm453, 1, 0
        %v458 = vsel %vm454, 1, 0
        %459 = vset.pattern.permute.xlu0 0
        %460 = vperm.xlu0 %459, %v455
        %v461 = vpop.permute.xlu0 %460
        %462 = vset.pattern.permute.xlu0 0
        %463 = vperm.xlu0 %462, %v456
        %v464 = vpop.permute.xlu0 %463
        %465 = vset.pattern.permute.xlu0 0
        %466 = vperm.xlu0 %465, %v457
        %v467 = vpop.permute.xlu0 %466
        %468 = vset.pattern.permute.xlu0 0
        %469 = vperm.xlu0 %468, %v458
        %v470 = vpop.permute.xlu0 %469
        %vm471 = vcmp.eq.s32.totalorder %v461, 1
        %vm472 = vcmp.eq.s32.totalorder %v464, 1
        %vm473 = vcmp.eq.s32.totalorder %v467, 1
        %vm474 = vcmp.eq.s32.totalorder %v470, 1
        %v475 = vsel %vm471, %v436, %v431
        %v476 = vsel %vm472, %v438, %v432
        %v477 = vsel %vm473, %v440, %v433
        %v478 = vsel %vm474, %v442, %v434
        %v479 = vlaneseq
        %v480 = vand.u32 %v479, 127
        %481 = vset.pattern.permute.xlu0 0
        %482 = vperm.xlu0 %481, %v171
        %v483 = vpop.permute.xlu0 %482
        %484 = vset.pattern.permute.xlu0 0
        %485 = vperm.xlu0 %484, %v172
        %v486 = vpop.permute.xlu0 %485
        %487 = vset.pattern.permute.xlu0 0
        %488 = vperm.xlu0 %487, %v173
        %v489 = vpop.permute.xlu0 %488
        %490 = vset.pattern.permute.xlu0 0
        %491 = vperm.xlu0 %490, %v174
        %v492 = vpop.permute.xlu0 %491
        %vm493 = vcmp.ge.s32.totalorder %v480, %v483
        %vm494 = vcmp.ge.s32.totalorder %v480, %v486
        %vm495 = vcmp.ge.s32.totalorder %v480, %v489
        %vm496 = vcmp.ge.s32.totalorder %v480, %v492
        %v497 = vsel %vm493, %v475, 0.0
        %v498 = vsel %vm494, %v476, 0.0
        %v499 = vsel %vm495, %v477, 0.0
        %v500 = vsel %vm496, %v478, 0.0
        %501 = vst [vmem:[%s153] sm:$0xff] %v497
        %502 = vst [vmem:[%s153 + $0x8] sm:$0xff] %v498
        %503 = vst [vmem:[%s153 + $0x10] sm:$0xff] %v499
        %504 = vst [vmem:[%s153 + $0x18] sm:$0xff] %v500
        %s505 = sand.u32 %s76, 1
        %s506 = scalar_lea.sflag [#allocation3], %s505
        %s507 = sand.u32 %s76, 1
        %s508 = smul.addr %s507, 32
        %s509 = scalar_lea.vmem [#allocation2], %s508
        // Predicated region
        $region29: #{tpu_custom_call.1} parent=27 // pred_check
          %p510 = pneg %p86
        $region30: #{tpu_custom_call.1} parent=27 // pred_check_branch
          %512 = sbr.rel (%p510) target = $region32
        $region31: #{tpu_custom_call.1} parent=27 // pred_region
          %s513 = smul.u32 4, %s16
          %s515 = ssub.s32 512, 512
          %516 = vsyncadd %s506, %s515
          %s517 = smul.addr %s513, 128
          %s518 = scalar_lea.hbm %s2, %s517
          %s519 = sshll.u32 %s509, 4
          %s520 = int_to_ptr.vmem [resolvable:$true] %s519
          %525 = dma.vmem_to_hbm [thread:$0]  %s520, 512, %s518, %s506, 128, 128, 8
        $region32: #{tpu_custom_call.1} parent=27 // pred_fallthru
          _
      $region28: #{tpu_custom_call.1} parent=5 // pred_fallthru
        _
      %p526 = scmp.le.s32.totalorder 2, %s11
      // Predicated region
      $region33: #{tpu_custom_call.1} parent=5 // pred_check
        %p527 = pneg %p526
      $region34: #{tpu_custom_call.1} parent=5 // pred_check_branch
        %529 = sbr.rel (%p527) target = $region36
      $region35: #{tpu_custom_call.1} parent=5 // pred_region
        %s530 = ssub.s32 %s11, 2
        // Predicated region
        $region37: #{tpu_custom_call.1} parent=35 // pred_check
          %p531 = pneg %p92
        $region38: #{tpu_custom_call.1} parent=35 // pred_check_branch
          %533 = sbr.rel (%p531) target = $region40
        $region39: #{tpu_custom_call.1} parent=35 // pred_region
          %s534 = sand.u32 %s77, 1
          %s535 = scalar_lea.sflag [#allocation3], %s534
          %s536 = sand.u32 %s77, 1
          %s537 = smul.addr %s536, 32
          %s538 = scalar_lea.vmem [#allocation2], %s537
          %539 = dma.done %s535, 512
        $region40: #{tpu_custom_call.1} parent=35 // pred_fallthru
          _
      $region36: #{tpu_custom_call.1} parent=5 // pred_fallthru
        _
    $region6: #{tpu_custom_call.1} parent=1 // loop_footer
      %s15 = sadd.s32 1, %s11
    $region7: #{tpu_custom_call.1} parent=1 // loop_footer_branch
      %10 = sbr.rel target = $region3
    $region8: #{tpu_custom_call.1} parent=1 // loop_exit
      _
    %540 = vsyncpa [#allocation3], 1
    %s541 = scalar_lea.sflag [#allocation3], 1
    %542 = vsyncpa %s541, 1

</llo_original>
